<compile_context>
chip_gen: v7x
topology: tpu7x:2x2x1
jax: 0.10.0
libtpu: 0.0.40
codegen_flags: <defaults>
</compile_context>

<pallas_src>
import jax
import jax.numpy as jnp
from jax.experimental import pallas as pl
from jax.experimental.pallas import tpu as pltpu


def _round_up(n, m):
    return ((n + m - 1) // m) * m


def autoencoder_kernel(x_ref, w1_ref, b1_ref, w2_ref, b2_ref, o_ref):
    # Encoder: h = relu(x @ W1 + b1); accumulate in f32 on the MXU.
    h = jnp.dot(x_ref[...], w1_ref[...], preferred_element_type=jnp.float32)
    h = jnp.maximum(h + b1_ref[...].astype(jnp.float32), 0.0)
    # Decoder: y = relu(h @ W2 + b2). The cast of h to w2's dtype is intentional:
    # a no-op for f32 weights, an explicit downcast when running bf16 MXU inputs.
    y = jnp.dot(h.astype(w2_ref.dtype), w2_ref[...],
                preferred_element_type=jnp.float32)
    y = jnp.maximum(y + b2_ref[...].astype(jnp.float32), 0.0)
    o_ref[...] = y.astype(o_ref.dtype)


def autoencoder_forward(x, w1, b1, w2, b2, *, block_b=1024, compute_dtype=None):
    """AutoEncoder forward.

    x : (B, indim)
    w1: (indim, hdim),  b1: (1, hdim)
    w2: (hdim, indim),  b2: (1, indim)
    block_b: batch tile size for large batches (kept <= ~1024 so the
             double-buffered (tb, 512) x/out tiles fit v7x's 32 MiB scoped VMEM
             default with plenty of headroom).
    compute_dtype: optionally cast x/w1/w2 (e.g. jnp.bfloat16) for the MXU;
             accumulation stays f32 and bias/ReLU stay f32 inside the kernel.
    """
    B, indim = x.shape
    hdim = w1.shape[1]
    out_dtype = x.dtype

    # Lane / sublane / MXU alignment (zero-padding, exact — see header comment).
    indim_p = _round_up(indim, 128)        # 484 -> 512
    hdim_p = _round_up(hdim, 128)          # 87  -> 128
    tb = _round_up(min(block_b, _round_up(B, 8)), 8)
    b_p = _round_up(B, tb)
    n_tiles = b_p // tb

    if compute_dtype is not None:
        x = x.astype(compute_dtype)
        w1 = w1.astype(compute_dtype)
        w2 = w2.astype(compute_dtype)

    xp = jnp.pad(x, ((0, b_p - B), (0, indim_p - indim)))
    w1p = jnp.pad(w1, ((0, indim_p - indim), (0, hdim_p - hdim)))
    b1p = jnp.pad(b1, ((0, 0), (0, hdim_p - hdim)))
    w2p = jnp.pad(w2, ((0, hdim_p - hdim), (0, indim_p - indim)))
    b2p = jnp.pad(b2, ((0, 0), (0, indim_p - indim)))

    bytes_accessed = (
        xp.size * xp.dtype.itemsize
        + w1p.size * w1p.dtype.itemsize + b1p.size * b1p.dtype.itemsize
        + w2p.size * w2p.dtype.itemsize + b2p.size * b2p.dtype.itemsize
        + b_p * indim_p * jnp.dtype(out_dtype).itemsize)
    cost = pl.CostEstimate(
        flops=2 * b_p * (indim_p * hdim_p + hdim_p * indim_p),
        transcendentals=0,
        bytes_accessed=bytes_accessed)

    out_p = pl.pallas_call(
        autoencoder_kernel,
        out_shape=jax.ShapeDtypeStruct((b_p, indim_p), out_dtype),
        grid_spec=pltpu.PrefetchScalarGridSpec(
            num_scalar_prefetch=0,
            grid=(n_tiles,),
            in_specs=[
                # x: tiled along batch -> software-pipelined prefetch/writeback.
                pl.BlockSpec((tb, indim_p), lambda i: (i, 0)),
                # Weights/biases: constant block index -> DMA'd once, then
                # VMEM-resident across all batch tiles (~0.5 MB total padded f32).
                pl.BlockSpec((indim_p, hdim_p), lambda i: (0, 0)),
                pl.BlockSpec((1, hdim_p), lambda i: (0, 0)),
                pl.BlockSpec((hdim_p, indim_p), lambda i: (0, 0)),
                pl.BlockSpec((1, indim_p), lambda i: (0, 0)),
            ],
            out_specs=pl.BlockSpec((tb, indim_p), lambda i: (i, 0)),
        ),
        compiler_params=pltpu.CompilerParams(
            # Batch tiles are independent -> shard grid across the 2 TCs on v7x;
            # harmless on single-TC v5e/v6e.
            dimension_semantics=("parallel",),
        ),
        cost_estimate=cost,
    )(xp, w1p, b1p, w2p, b2p)

    # Slice away the batch / feature padding.
    return out_p[:B, :indim]


def init_params(key, indim=484, hdim=87, dtype=jnp.float32):
    # Deterministic synthetic init mimicking PyTorch's uniform(-1/sqrt(fan_in), 1/sqrt(fan_in)).
    k1, k2, k3, k4 = jax.random.split(key, 4)
    bound1 = 1.0 / jnp.sqrt(indim)
    bound2 = 1.0 / jnp.sqrt(hdim)
    w1 = jax.random.uniform(k1, (indim, hdim), dtype, -bound1, bound1)
    b1 = jax.random.uniform(k2, (1, hdim), dtype, -bound1, bound1)
    w2 = jax.random.uniform(k3, (hdim, indim), dtype, -bound2, bound2)
    b2 = jax.random.uniform(k4, (1, indim), dtype, -bound2, bound2)
    return w1, b1, w2, b2


if __name__ == "__main__":
    indim, hdim, batch = 484, 87, 4
    key = jax.random.PRNGKey(0)
    kx, kp = jax.random.split(key)
    x = jax.random.normal(kx, (batch, indim), dtype=jnp.float32)
    w1, b1, w2, b2 = init_params(kp, indim, hdim)

    out = jax.jit(autoencoder_forward)(x, w1, b1, w2, b2)
    out = jax.block_until_ready(out)

    # Pure-JAX reference check.
    h_ref = jnp.maximum(x @ w1 + b1, 0.0)
    y_ref = jnp.maximum(h_ref @ w2 + b2, 0.0)
    assert out.shape == (batch, indim)
    assert jnp.allclose(out, y_ref, atol=1e-5, rtol=1e-5)

    print("KERNEL_OK")
</pallas_src>

<mosaic_0001>
module attributes {stable_mosaic.version = 11 : i64} {
  func.func @autoencoder_kernel(%arg0: i32, %arg1: memref<8x512xf32, #tpu.memory_space<vmem>>, %arg2: memref<512x128xf32, #tpu.memory_space<vmem>>, %arg3: memref<1x128xf32, #tpu.memory_space<vmem>>, %arg4: memref<128x512xf32, #tpu.memory_space<vmem>>, %arg5: memref<1x512xf32, #tpu.memory_space<vmem>>, %arg6: memref<8x512xf32, #tpu.memory_space<vmem>>) attributes {dimension_semantics = [#tpu.dimension_semantics<parallel>], iteration_bounds = array<i64: 1>, scalar_prefetch = 0 : i64, scratch_operands = 0 : i64, tpu.core_type = #tpu.core_type<tc>, window_params = [{transform_indices = @transform_0, window_bounds = array<i64: 8, 512>}, {pipeline_mode = #tpu.pipeline_mode<synchronous>, transform_indices = @transform_1, window_bounds = array<i64: 512, 128>}, {pipeline_mode = #tpu.pipeline_mode<synchronous>, transform_indices = @transform_2, window_bounds = array<i64: 1, 128>}, {pipeline_mode = #tpu.pipeline_mode<synchronous>, transform_indices = @transform_3, window_bounds = array<i64: 128, 512>}, {pipeline_mode = #tpu.pipeline_mode<synchronous>, transform_indices = @transform_4, window_bounds = array<i64: 1, 512>}, {transform_indices = @transform_5, window_bounds = array<i64: 8, 512>}]} {
    %c0 = arith.constant 0 : index
    %c0_0 = arith.constant 0 : index
    %0 = vector.load %arg1[%c0, %c0_0] : memref<8x512xf32, #tpu.memory_space<vmem>>, vector<8x512xf32>
    %c0_1 = arith.constant 0 : index
    %c0_2 = arith.constant 0 : index
    %1 = vector.load %arg2[%c0_1, %c0_2] : memref<512x128xf32, #tpu.memory_space<vmem>>, vector<512x128xf32>
    %cst = arith.constant dense<0.000000e+00> : vector<8x128xf32>
    %2 = tpu.matmul %0, %1, %cst {dimension_numbers = #tpu.dot_dimension_numbers<[1], [0], [0], [1], [0, 0, 1, 1], [], []>} : vector<8x512xf32>, vector<512x128xf32>, vector<8x128xf32> -> vector<8x128xf32>
    %c0_3 = arith.constant 0 : index
    %c0_4 = arith.constant 0 : index
    %3 = vector.load %arg3[%c0_3, %c0_4] : memref<1x128xf32, #tpu.memory_space<vmem>>, vector<1x128xf32>
    %4 = vector.broadcast %3 : vector<1x128xf32> to vector<8x128xf32>
    %5 = arith.addf %2, %4 : vector<8x128xf32>
    %cst_5 = arith.constant 0.000000e+00 : f32
    %6 = vector.broadcast %cst_5 : f32 to vector<8x128xf32>
    %7 = arith.maximumf %5, %6 : vector<8x128xf32>
    %c0_6 = arith.constant 0 : index
    %c0_7 = arith.constant 0 : index
    %8 = vector.load %arg4[%c0_6, %c0_7] : memref<128x512xf32, #tpu.memory_space<vmem>>, vector<128x512xf32>
    %cst_8 = arith.constant dense<0.000000e+00> : vector<8x512xf32>
    %9 = tpu.matmul %7, %8, %cst_8 {dimension_numbers = #tpu.dot_dimension_numbers<[1], [0], [0], [1], [0, 0, 1, 1], [], []>} : vector<8x128xf32>, vector<128x512xf32>, vector<8x512xf32> -> vector<8x512xf32>
    %c0_9 = arith.constant 0 : index
    %c0_10 = arith.constant 0 : index
    %10 = vector.load %arg5[%c0_9, %c0_10] : memref<1x512xf32, #tpu.memory_space<vmem>>, vector<1x512xf32>
    %11 = vector.broadcast %10 : vector<1x512xf32> to vector<8x512xf32>
    %12 = arith.addf %9, %11 : vector<8x512xf32>
    %cst_11 = arith.constant 0.000000e+00 : f32
    %13 = vector.broadcast %cst_11 : f32 to vector<8x512xf32>
    %14 = arith.maximumf %12, %13 : vector<8x512xf32>
    %c0_12 = arith.constant 0 : index
    %c0_13 = arith.constant 0 : index
    %15 = vector.load %arg6[%c0_12, %c0_13] : memref<8x512xf32, #tpu.memory_space<vmem>>, vector<8x512xf32>
    tpu.vector_store %arg6[%c0_12, %c0_13], %14 {strides = array<i32>} : memref<8x512xf32, #tpu.memory_space<vmem>>, vector<8x512xf32>,
    return
  }
  func.func @transform_0(%arg0: i32) -> (i32, i32) {
    %c0_i32 = arith.constant 0 : i32
    %c0_i32_0 = arith.constant 0 : i32
    return %arg0, %c0_i32 : i32, i32
  }
  func.func @transform_1(%arg0: i32) -> (i32, i32) {
    %c0_i32 = arith.constant 0 : i32
    %c0_i32_0 = arith.constant 0 : i32
    %c0_i32_1 = arith.constant 0 : i32
    return %c0_i32, %c0_i32_0 : i32, i32
  }
  func.func @transform_2(%arg0: i32) -> (i32, i32) {
    %c0_i32 = arith.constant 0 : i32
    %c0_i32_0 = arith.constant 0 : i32
    %c0_i32_1 = arith.constant 0 : i32
    return %c0_i32, %c0_i32_0 : i32, i32
  }
  func.func @transform_3(%arg0: i32) -> (i32, i32) {
    %c0_i32 = arith.constant 0 : i32
    %c0_i32_0 = arith.constant 0 : i32
    %c0_i32_1 = arith.constant 0 : i32
    return %c0_i32, %c0_i32_0 : i32, i32
  }
  func.func @transform_4(%arg0: i32) -> (i32, i32) {
    %c0_i32 = arith.constant 0 : i32
    %c0_i32_0 = arith.constant 0 : i32
    %c0_i32_1 = arith.constant 0 : i32
    return %c0_i32, %c0_i32_0 : i32, i32
  }
  func.func @transform_5(%arg0: i32) -> (i32, i32) {
    %c0_i32 = arith.constant 0 : i32
    %c0_i32_0 = arith.constant 0 : i32
    return %arg0, %c0_i32 : i32, i32
  }
}

</mosaic_0001>

<llo_original>
// kernel: autoencoder_forward.1
$region0: #{autoencoder_forward.1}
  #allocation0 [shape = 'u32[]', space=smem, size = 0x4, offset = 0x4, fixed_abs, tag = 'smem constant byte address 0x4 - core index']
  #allocation1 [shape = 'u32[144,128]{1,0:T(1,128)}', space=vmem, size = 0x12000, scoped, tag = 'internal scratch']
  %s0 = inlined_call_operand.vmem [shape: f32[8,512], index: 0, kind: input, shape index: {}]
  %s1 = inlined_call_operand.vmem [shape: f32[512,128], index: 1, kind: input, shape index: {}]
  %s2 = inlined_call_operand.vmem [shape: f32[1,128], index: 2, kind: input, shape index: {}]
  %s3 = inlined_call_operand.vmem [shape: f32[128,512], index: 3, kind: input, shape index: {}]
  %s4 = inlined_call_operand.vmem [shape: f32[1,512], index: 4, kind: input, shape index: {}]
  %s5 = inlined_call_operand.vmem [shape: f32[8,512], index: 5, kind: output, shape index: {}]
  %s6 = sld [smem:[#allocation0]]
  $region30: #{autoencoder_forward.1} parent=0
    _
  %s8 = ssub.s32 1, %s6
  %s9 = scalar_select 0, %s8, %s6
  // Predicated region
  $region2: #{autoencoder_forward.1} parent=0 // pred_check
    _
  $region3: #{autoencoder_forward.1} parent=0 // pred_check_branch
    %11 = sbr.rel (0) target = $region5
  $region4: #{autoencoder_forward.1} parent=0 // pred_region
    _
  $region5: #{autoencoder_forward.1} parent=0 // pred_fallthru
    _
  // Predicated region
  $region6: #{autoencoder_forward.1} parent=0 // pred_check
    _
  $region7: #{autoencoder_forward.1} parent=0 // pred_check_branch
    %13 = sbr.rel (0) target = $region9
  $region8: #{autoencoder_forward.1} parent=0 // pred_region
    _
  $region9: #{autoencoder_forward.1} parent=0 // pred_fallthru
    _
  // Predicated region
  $region10: #{autoencoder_forward.1} parent=0 // pred_check
    _
  $region11: #{autoencoder_forward.1} parent=0 // pred_check_branch
    %15 = sbr.rel (0) target = $region13
  $region12: #{autoencoder_forward.1} parent=0 // pred_region
    _
  $region13: #{autoencoder_forward.1} parent=0 // pred_fallthru
    _
  // Predicated region
  $region14: #{autoencoder_forward.1} parent=0 // pred_check
    _
  $region15: #{autoencoder_forward.1} parent=0 // pred_check_branch
    %17 = sbr.rel (0) target = $region17
  $region16: #{autoencoder_forward.1} parent=0 // pred_region
    _
  $region17: #{autoencoder_forward.1} parent=0 // pred_fallthru
    _
  // Predicated region
  $region18: #{autoencoder_forward.1} parent=0 // pred_check
    _
  $region19: #{autoencoder_forward.1} parent=0 // pred_check_branch
    %19 = sbr.rel (0) target = $region21
  $region20: #{autoencoder_forward.1} parent=0 // pred_region
    _
  $region21: #{autoencoder_forward.1} parent=0 // pred_fallthru
    _
  %v20 = vld [vmem:[%s0] sm:$0xff]
  %v21 = vld [vmem:[%s0 + $0x8] sm:$0xff]
  %v22 = vld [vmem:[%s0 + $0x10] sm:$0xff]
  %v23 = vld [vmem:[%s0 + $0x18] sm:$0xff]
  %v24 = vld [vmem:[%s1] sm:$0xff]
  %v25 = vld [vmem:[%s1 + $0x8] sm:$0xff]
  %v26 = vld [vmem:[%s1 + $0x10] sm:$0xff]
  %v27 = vld [vmem:[%s1 + $0x18] sm:$0xff]
  %v28 = vld [vmem:[%s1 + $0x20] sm:$0xff]
  %v29 = vld [vmem:[%s1 + $0x28] sm:$0xff]
  %v30 = vld [vmem:[%s1 + $0x30] sm:$0xff]
  %v31 = vld [vmem:[%s1 + $0x38] sm:$0xff]
  %v32 = vld [vmem:[%s1 + $0x40] sm:$0xff]
  %v33 = vld [vmem:[%s1 + $0x48] sm:$0xff]
  %v34 = vld [vmem:[%s1 + $0x50] sm:$0xff]
  %v35 = vld [vmem:[%s1 + $0x58] sm:$0xff]
  %v36 = vld [vmem:[%s1 + $0x60] sm:$0xff]
  %v37 = vld [vmem:[%s1 + $0x68] sm:$0xff]
  %v38 = vld [vmem:[%s1 + $0x70] sm:$0xff]
  %v39 = vld [vmem:[%s1 + $0x78] sm:$0xff]
  %v40 = vld [vmem:[%s1 + $0x80] sm:$0xff]
  %v41 = vld [vmem:[%s1 + $0x88] sm:$0xff]
  %v42 = vld [vmem:[%s1 + $0x90] sm:$0xff]
  %v43 = vld [vmem:[%s1 + $0x98] sm:$0xff]
  %v44 = vld [vmem:[%s1 + $0xa0] sm:$0xff]
  %v45 = vld [vmem:[%s1 + $0xa8] sm:$0xff]
  %v46 = vld [vmem:[%s1 + $0xb0] sm:$0xff]
  %v47 = vld [vmem:[%s1 + $0xb8] sm:$0xff]
  %v48 = vld [vmem:[%s1 + $0xc0] sm:$0xff]
  %v49 = vld [vmem:[%s1 + $0xc8] sm:$0xff]
  %v50 = vld [vmem:[%s1 + $0xd0] sm:$0xff]
  %v51 = vld [vmem:[%s1 + $0xd8] sm:$0xff]
  %v52 = vld [vmem:[%s1 + $0xe0] sm:$0xff]
  %v53 = vld [vmem:[%s1 + $0xe8] sm:$0xff]
  %v54 = vld [vmem:[%s1 + $0xf0] sm:$0xff]
  %v55 = vld [vmem:[%s1 + $0xf8] sm:$0xff]
  %v56 = vld [vmem:[%s1 + $0x100] sm:$0xff]
  %v57 = vld [vmem:[%s1 + $0x108] sm:$0xff]
  %v58 = vld [vmem:[%s1 + $0x110] sm:$0xff]
  %v59 = vld [vmem:[%s1 + $0x118] sm:$0xff]
  %v60 = vld [vmem:[%s1 + $0x120] sm:$0xff]
  %v61 = vld [vmem:[%s1 + $0x128] sm:$0xff]
  %v62 = vld [vmem:[%s1 + $0x130] sm:$0xff]
  %v63 = vld [vmem:[%s1 + $0x138] sm:$0xff]
  %v64 = vld [vmem:[%s1 + $0x140] sm:$0xff]
  %v65 = vld [vmem:[%s1 + $0x148] sm:$0xff]
  %v66 = vld [vmem:[%s1 + $0x150] sm:$0xff]
  %v67 = vld [vmem:[%s1 + $0x158] sm:$0xff]
  %v68 = vld [vmem:[%s1 + $0x160] sm:$0xff]
  %v69 = vld [vmem:[%s1 + $0x168] sm:$0xff]
  %v70 = vld [vmem:[%s1 + $0x170] sm:$0xff]
  %v71 = vld [vmem:[%s1 + $0x178] sm:$0xff]
  %v72 = vld [vmem:[%s1 + $0x180] sm:$0xff]
  %v73 = vld [vmem:[%s1 + $0x188] sm:$0xff]
  %v74 = vld [vmem:[%s1 + $0x190] sm:$0xff]
  %v75 = vld [vmem:[%s1 + $0x198] sm:$0xff]
  %v76 = vld [vmem:[%s1 + $0x1a0] sm:$0xff]
  %v77 = vld [vmem:[%s1 + $0x1a8] sm:$0xff]
  %v78 = vld [vmem:[%s1 + $0x1b0] sm:$0xff]
  %v79 = vld [vmem:[%s1 + $0x1b8] sm:$0xff]
  %v80 = vld [vmem:[%s1 + $0x1c0] sm:$0xff]
  %v81 = vld [vmem:[%s1 + $0x1c8] sm:$0xff]
  %v82 = vld [vmem:[%s1 + $0x1d0] sm:$0xff]
  %v83 = vld [vmem:[%s1 + $0x1d8] sm:$0xff]
  %v84 = vld [vmem:[%s1 + $0x1e0] sm:$0xff]
  %v85 = vld [vmem:[%s1 + $0x1e8] sm:$0xff]
  %v86 = vld [vmem:[%s1 + $0x1f0] sm:$0xff]
  %v87 = vld [vmem:[%s1 + $0x1f8] sm:$0xff]
  %v88 = vld [vmem:[%s2] sm:$0x1]
  %v90 = vlaneseq
  %v91 = vshrl.u32 %v90, 7
  %v92 = vsub.s32 0, %v91
  %v93 = vrot.slane %v88, %v92
  %95 = vmatprep.subr.mxu0 0.0
  %96 = vmatpush1.msra.mxu0 %v24
  %97 = vmatprep.subr.mxu0 0.0
  %98 = vmatpush1.msra.mxu0 %v25
  %99 = vmatprep.subr.mxu0 0.0
  %100 = vmatpush1.msra.mxu0 %v26
  %101 = vmatprep.subr.mxu0 0.0
  %102 = vmatpush1.msra.mxu0 %v27
  %103 = vmatprep.subr.mxu0 0.0
  %104 = vmatpush1.msra.mxu0 %v28
  %105 = vmatprep.subr.mxu0 0.0
  %106 = vmatpush1.msra.mxu0 %v29
  %107 = vmatprep.subr.mxu0 0.0
  %108 = vmatpush1.msra.mxu0 %v30
  %109 = vmatprep.subr.mxu0 0.0
  %110 = vmatpush1.msra.mxu0 %v31
  %111 = vmatprep.subr.mxu0 0.0
  %112 = vmatpush1.msra.mxu0 %v32
  %113 = vmatprep.subr.mxu0 0.0
  %114 = vmatpush1.msra.mxu0 %v33
  %115 = vmatprep.subr.mxu0 0.0
  %116 = vmatpush1.msra.mxu0 %v34
  %117 = vmatprep.subr.mxu0 0.0
  %118 = vmatpush1.msra.mxu0 %v35
  %119 = vmatprep.subr.mxu0 0.0
  %120 = vmatpush1.msra.mxu0 %v36
  %121 = vmatprep.subr.mxu0 0.0
  %122 = vmatpush1.msra.mxu0 %v37
  %123 = vmatprep.subr.mxu0 0.0
  %124 = vmatpush1.msra.mxu0 %v38
  %125 = vmatprep.subr.mxu0 0.0
  %126 = vmatpush1.msra.mxu0 %v39
  %127 = vmatprep.subr.mxu0 0.0
  %128 = vmatpush1.msra.mxu0 %v40
  %129 = vmatprep.subr.mxu0 0.0
  %130 = vmatpush1.msra.mxu0 %v41
  %131 = vmatprep.subr.mxu0 0.0
  %132 = vmatpush1.msra.mxu0 %v42
  %133 = vmatprep.subr.mxu0 0.0
  %134 = vmatpush1.msra.mxu0 %v43
  %135 = vmatprep.subr.mxu0 0.0
  %136 = vmatpush1.msra.mxu0 %v44
  %137 = vmatprep.subr.mxu0 0.0
  %138 = vmatpush1.msra.mxu0 %v45
  %139 = vmatprep.subr.mxu0 0.0
  %140 = vmatpush1.msra.mxu0 %v46
  %141 = vmatprep.subr.mxu0 0.0
  %142 = vmatpush1.msra.mxu0 %v47
  %143 = vmatprep.subr.mxu0 0.0
  %144 = vmatpush1.msra.mxu0 %v48
  %145 = vmatprep.subr.mxu0 0.0
  %146 = vmatpush1.msra.mxu0 %v49
  %147 = vmatprep.subr.mxu0 0.0
  %148 = vmatpush1.msra.mxu0 %v50
  %149 = vmatprep.subr.mxu0 0.0
  %150 = vmatpush1.msra.mxu0 %v51
  %151 = vmatprep.subr.mxu0 0.0
  %152 = vmatpush1.msra.mxu0 %v52
  %153 = vmatprep.subr.mxu0 0.0
  %154 = vmatpush1.msra.mxu0 %v53
  %155 = vmatprep.subr.mxu0 0.0
  %156 = vmatpush1.msra.mxu0 %v54
  %157 = vmatprep.subr.mxu0 0.0
  %158 = vmatpush1.msra.mxu0 %v55
  %159 = vmatprep.mubr.f32.mxu0 %v21
  %160 = vmatmul.mubr.f32.gmra.mrb[0].mxu0 %v20
  %v161 = vpop.f32.mrb[0].mxu0
  %v162 = vadd.f32 %v93, %v161
  %v163 = vpop.f32.mrb[0].mxu0
  %164 = vdwg.mxu0
  %165 = vmatprep.subr.mxu0 0.0
  %166 = vmatpush1.msra.mxu0 %v56
  %167 = vmatprep.subr.mxu0 0.0
  %168 = vmatpush1.msra.mxu0 %v57
  %169 = vmatprep.subr.mxu0 0.0
  %170 = vmatpush1.msra.mxu0 %v58
  %171 = vmatprep.subr.mxu0 0.0
  %172 = vmatpush1.msra.mxu0 %v59
  %173 = vmatprep.subr.mxu0 0.0
  %174 = vmatpush1.msra.mxu0 %v60
  %175 = vmatprep.subr.mxu0 0.0
  %176 = vmatpush1.msra.mxu0 %v61
  %177 = vmatprep.subr.mxu0 0.0
  %178 = vmatpush1.msra.mxu0 %v62
  %179 = vmatprep.subr.mxu0 0.0
  %180 = vmatpush1.msra.mxu0 %v63
  %181 = vmatprep.subr.mxu0 0.0
  %182 = vmatpush1.msra.mxu0 %v64
  %183 = vmatprep.subr.mxu0 0.0
  %184 = vmatpush1.msra.mxu0 %v65
  %185 = vmatprep.subr.mxu0 0.0
  %186 = vmatpush1.msra.mxu0 %v66
  %187 = vmatprep.subr.mxu0 0.0
  %188 = vmatpush1.msra.mxu0 %v67
  %189 = vmatprep.subr.mxu0 0.0
  %190 = vmatpush1.msra.mxu0 %v68
  %191 = vmatprep.subr.mxu0 0.0
  %192 = vmatpush1.msra.mxu0 %v69
  %193 = vmatprep.subr.mxu0 0.0
  %194 = vmatpush1.msra.mxu0 %v70
  %195 = vmatprep.subr.mxu0 0.0
  %196 = vmatpush1.msra.mxu0 %v71
  %197 = vmatprep.subr.mxu0 0.0
  %198 = vmatpush1.msra.mxu0 %v72
  %199 = vmatprep.subr.mxu0 0.0
  %200 = vmatpush1.msra.mxu0 %v73
  %201 = vmatprep.subr.mxu0 0.0
  %202 = vmatpush1.msra.mxu0 %v74
  %203 = vmatprep.subr.mxu0 0.0
  %204 = vmatpush1.msra.mxu0 %v75
  %205 = vmatprep.subr.mxu0 0.0
  %206 = vmatpush1.msra.mxu0 %v76
  %207 = vmatprep.subr.mxu0 0.0
  %208 = vmatpush1.msra.mxu0 %v77
  %209 = vmatprep.subr.mxu0 0.0
  %210 = vmatpush1.msra.mxu0 %v78
  %211 = vmatprep.subr.mxu0 0.0
  %212 = vmatpush1.msra.mxu0 %v79
  %213 = vmatprep.subr.mxu0 0.0
  %214 = vmatpush1.msra.mxu0 %v80
  %215 = vmatprep.subr.mxu0 0.0
  %216 = vmatpush1.msra.mxu0 %v81
  %217 = vmatprep.subr.mxu0 0.0
  %218 = vmatpush1.msra.mxu0 %v82
  %219 = vmatprep.subr.mxu0 0.0
  %220 = vmatpush1.msra.mxu0 %v83
  %221 = vmatprep.subr.mxu0 0.0
  %222 = vmatpush1.msra.mxu0 %v84
  %223 = vmatprep.subr.mxu0 0.0
  %224 = vmatpush1.msra.mxu0 %v85
  %225 = vmatprep.subr.mxu0 0.0
  %226 = vmatpush1.msra.mxu0 %v86
  %227 = vmatprep.subr.mxu0 0.0
  %228 = vmatpush1.msra.mxu0 %v87
  %229 = vmatprep.mubr.f32.mxu0 %v23
  %230 = vmatmul.mubr.f32.gmra.mrb[0].mxu0 %v22
  %v231 = vpop.f32.mrb[0].mxu0
  %v232 = vadd.f32 %v162, %v231
  %v233 = vpop.f32.mrb[0].mxu0
  %234 = vdwg.mxu0
  %v235 = vmax.f32 %v232, 0.0
  %v236 = vld [vmem:[%s3] sm:$0xff]
  %v237 = vld [vmem:[%s3 + $0x8] sm:$0xff]
  %v238 = vld [vmem:[%s3 + $0x10] sm:$0xff]
  %v239 = vld [vmem:[%s3 + $0x18] sm:$0xff]
  %v240 = vld [vmem:[%s3 + $0x20] sm:$0xff]
  %v241 = vld [vmem:[%s3 + $0x28] sm:$0xff]
  %v242 = vld [vmem:[%s3 + $0x30] sm:$0xff]
  %v243 = vld [vmem:[%s3 + $0x38] sm:$0xff]
  %v244 = vld [vmem:[%s3 + $0x40] sm:$0xff]
  %v245 = vld [vmem:[%s3 + $0x48] sm:$0xff]
  %v246 = vld [vmem:[%s3 + $0x50] sm:$0xff]
  %v247 = vld [vmem:[%s3 + $0x58] sm:$0xff]
  %v248 = vld [vmem:[%s3 + $0x60] sm:$0xff]
  %v249 = vld [vmem:[%s3 + $0x68] sm:$0xff]
  %v250 = vld [vmem:[%s3 + $0x70] sm:$0xff]
  %v251 = vld [vmem:[%s3 + $0x78] sm:$0xff]
  %v252 = vld [vmem:[%s3 + $0x80] sm:$0xff]
  %v253 = vld [vmem:[%s3 + $0x88] sm:$0xff]
  %v254 = vld [vmem:[%s3 + $0x90] sm:$0xff]
  %v255 = vld [vmem:[%s3 + $0x98] sm:$0xff]
  %v256 = vld [vmem:[%s3 + $0xa0] sm:$0xff]
  %v257 = vld [vmem:[%s3 + $0xa8] sm:$0xff]
  %v258 = vld [vmem:[%s3 + $0xb0] sm:$0xff]
  %v259 = vld [vmem:[%s3 + $0xb8] sm:$0xff]
  %v260 = vld [vmem:[%s3 + $0xc0] sm:$0xff]
  %v261 = vld [vmem:[%s3 + $0xc8] sm:$0xff]
  %v262 = vld [vmem:[%s3 + $0xd0] sm:$0xff]
  %v263 = vld [vmem:[%s3 + $0xd8] sm:$0xff]
  %v264 = vld [vmem:[%s3 + $0xe0] sm:$0xff]
  %v265 = vld [vmem:[%s3 + $0xe8] sm:$0xff]
  %v266 = vld [vmem:[%s3 + $0xf0] sm:$0xff]
  %v267 = vld [vmem:[%s3 + $0xf8] sm:$0xff]
  %v268 = vld [vmem:[%s3 + $0x100] sm:$0xff]
  %v269 = vld [vmem:[%s3 + $0x108] sm:$0xff]
  %v270 = vld [vmem:[%s3 + $0x110] sm:$0xff]
  %v271 = vld [vmem:[%s3 + $0x118] sm:$0xff]
  %v272 = vld [vmem:[%s3 + $0x120] sm:$0xff]
  %v273 = vld [vmem:[%s3 + $0x128] sm:$0xff]
  %v274 = vld [vmem:[%s3 + $0x130] sm:$0xff]
  %v275 = vld [vmem:[%s3 + $0x138] sm:$0xff]
  %v276 = vld [vmem:[%s3 + $0x140] sm:$0xff]
  %v277 = vld [vmem:[%s3 + $0x148] sm:$0xff]
  %v278 = vld [vmem:[%s3 + $0x150] sm:$0xff]
  %v279 = vld [vmem:[%s3 + $0x158] sm:$0xff]
  %v280 = vld [vmem:[%s3 + $0x160] sm:$0xff]
  %v281 = vld [vmem:[%s3 + $0x168] sm:$0xff]
  %v282 = vld [vmem:[%s3 + $0x170] sm:$0xff]
  %v283 = vld [vmem:[%s3 + $0x178] sm:$0xff]
  %v284 = vld [vmem:[%s3 + $0x180] sm:$0xff]
  %v285 = vld [vmem:[%s3 + $0x188] sm:$0xff]
  %v286 = vld [vmem:[%s3 + $0x190] sm:$0xff]
  %v287 = vld [vmem:[%s3 + $0x198] sm:$0xff]
  %v288 = vld [vmem:[%s3 + $0x1a0] sm:$0xff]
  %v289 = vld [vmem:[%s3 + $0x1a8] sm:$0xff]
  %v290 = vld [vmem:[%s3 + $0x1b0] sm:$0xff]
  %v291 = vld [vmem:[%s3 + $0x1b8] sm:$0xff]
  %v292 = vld [vmem:[%s3 + $0x1c0] sm:$0xff]
  %v293 = vld [vmem:[%s3 + $0x1c8] sm:$0xff]
  %v294 = vld [vmem:[%s3 + $0x1d0] sm:$0xff]
  %v295 = vld [vmem:[%s3 + $0x1d8] sm:$0xff]
  %v296 = vld [vmem:[%s3 + $0x1e0] sm:$0xff]
  %v297 = vld [vmem:[%s3 + $0x1e8] sm:$0xff]
  %v298 = vld [vmem:[%s3 + $0x1f0] sm:$0xff]
  %v299 = vld [vmem:[%s3 + $0x1f8] sm:$0xff]
  %v300 = vld [vmem:[%s4] sm:$0xf]
  %v302 = vlaneseq
  %v303 = vshrl.u32 %v302, 7
  %v304 = vsub.s32 0, %v303
  %v305 = vrot.slane %v300, %v304
  %v306 = vlaneseq
  %v307 = vshrl.u32 %v306, 7
  %v308 = vsub.s32 1, %v307
  %v309 = vrot.slane %v300, %v308
  %v310 = vlaneseq
  %v311 = vshrl.u32 %v310, 7
  %v312 = vsub.s32 2, %v311
  %v313 = vrot.slane %v300, %v312
  %v314 = vlaneseq
  %v315 = vshrl.u32 %v314, 7
  %v316 = vsub.s32 3, %v315
  %v317 = vrot.slane %v300, %v316
  %322 = vmatprep.subr.mxu0 %v237
  %323 = vmatpush1.msra.mxu0 %v236
  %324 = vmatprep.subr.mxu0 %v241
  %325 = vmatpush1.msra.mxu0 %v240
  %326 = vmatprep.subr.mxu0 %v245
  %327 = vmatpush1.msra.mxu0 %v244
  %328 = vmatprep.subr.mxu0 %v249
  %329 = vmatpush1.msra.mxu0 %v248
  %330 = vmatprep.subr.mxu0 %v253
  %331 = vmatpush1.msra.mxu0 %v252
  %332 = vmatprep.subr.mxu0 %v257
  %333 = vmatpush1.msra.mxu0 %v256
  %334 = vmatprep.subr.mxu0 %v261
  %335 = vmatpush1.msra.mxu0 %v260
  %336 = vmatprep.subr.mxu0 %v265
  %337 = vmatpush1.msra.mxu0 %v264
  %338 = vmatprep.subr.mxu0 %v269
  %339 = vmatpush1.msra.mxu0 %v268
  %340 = vmatprep.subr.mxu0 %v273
  %341 = vmatpush1.msra.mxu0 %v272
  %342 = vmatprep.subr.mxu0 %v277
  %343 = vmatpush1.msra.mxu0 %v276
  %344 = vmatprep.subr.mxu0 %v281
  %345 = vmatpush1.msra.mxu0 %v280
  %346 = vmatprep.subr.mxu0 %v285
  %347 = vmatpush1.msra.mxu0 %v284
  %348 = vmatprep.subr.mxu0 %v289
  %349 = vmatpush1.msra.mxu0 %v288
  %350 = vmatprep.subr.mxu0 %v293
  %351 = vmatpush1.msra.mxu0 %v292
  %352 = vmatprep.subr.mxu0 %v297
  %353 = vmatpush1.msra.mxu0 %v296
  %354 = vmatprep.subr.mxu0 0.0
  %355 = vmatpush1.msra.mxu0 0.0
  %356 = vmatprep.subr.mxu0 0.0
  %357 = vmatpush1.msra.mxu0 0.0
  %358 = vmatprep.subr.mxu0 0.0
  %359 = vmatpush1.msra.mxu0 0.0
  %360 = vmatprep.subr.mxu0 0.0
  %361 = vmatpush1.msra.mxu0 0.0
  %362 = vmatprep.subr.mxu0 0.0
  %363 = vmatpush1.msra.mxu0 0.0
  %364 = vmatprep.subr.mxu0 0.0
  %365 = vmatpush1.msra.mxu0 0.0
  %366 = vmatprep.subr.mxu0 0.0
  %367 = vmatpush1.msra.mxu0 0.0
  %368 = vmatprep.subr.mxu0 0.0
  %369 = vmatpush1.msra.mxu0 0.0
  %370 = vmatprep.subr.mxu0 0.0
  %371 = vmatpush1.msra.mxu0 0.0
  %372 = vmatprep.subr.mxu0 0.0
  %373 = vmatpush1.msra.mxu0 0.0
  %374 = vmatprep.subr.mxu0 0.0
  %375 = vmatpush1.msra.mxu0 0.0
  %376 = vmatprep.subr.mxu0 0.0
  %377 = vmatpush1.msra.mxu0 0.0
  %378 = vmatprep.subr.mxu0 0.0
  %379 = vmatpush1.msra.mxu0 0.0
  %380 = vmatprep.subr.mxu0 0.0
  %381 = vmatpush1.msra.mxu0 0.0
  %382 = vmatprep.subr.mxu0 0.0
  %383 = vmatpush1.msra.mxu0 0.0
  %384 = vmatprep.subr.mxu0 0.0
  %385 = vmatpush1.msra.mxu0 0.0
  %386 = vmatprep.mubr.f32.mxu0 0.0
  %387 = vmatmul.mubr.f32.gmra.mrb[0].mxu0 %v235
  %v388 = vpop.f32.mrb[0].mxu0
  %v389 = vadd.f32 %v305, %v388
  %v390 = vpop.f32.mrb[0].mxu0
  %v391 = vadd.f32 %v309, %v390
  %392 = vdwg.mxu0
  %393 = vmatprep.subr.mxu0 %v239
  %394 = vmatpush1.msra.mxu0 %v238
  %395 = vmatprep.subr.mxu0 %v243
  %396 = vmatpush1.msra.mxu0 %v242
  %397 = vmatprep.subr.mxu0 %v247
  %398 = vmatpush1.msra.mxu0 %v246
  %399 = vmatprep.subr.mxu0 %v251
  %400 = vmatpush1.msra.mxu0 %v250
  %401 = vmatprep.subr.mxu0 %v255
  %402 = vmatpush1.msra.mxu0 %v254
  %403 = vmatprep.subr.mxu0 %v259
  %404 = vmatpush1.msra.mxu0 %v258
  %405 = vmatprep.subr.mxu0 %v263
  %406 = vmatpush1.msra.mxu0 %v262
  %407 = vmatprep.subr.mxu0 %v267
  %408 = vmatpush1.msra.mxu0 %v266
  %409 = vmatprep.subr.mxu0 %v271
  %410 = vmatpush1.msra.mxu0 %v270
  %411 = vmatprep.subr.mxu0 %v275
  %412 = vmatpush1.msra.mxu0 %v274
  %413 = vmatprep.subr.mxu0 %v279
  %414 = vmatpush1.msra.mxu0 %v278
  %415 = vmatprep.subr.mxu0 %v283
  %416 = vmatpush1.msra.mxu0 %v282
  %417 = vmatprep.subr.mxu0 %v287
  %418 = vmatpush1.msra.mxu0 %v286
  %419 = vmatprep.subr.mxu0 %v291
  %420 = vmatpush1.msra.mxu0 %v290
  %421 = vmatprep.subr.mxu0 %v295
  %422 = vmatpush1.msra.mxu0 %v294
  %423 = vmatprep.subr.mxu0 %v299
  %424 = vmatpush1.msra.mxu0 %v298
  %425 = vmatprep.subr.mxu0 0.0
  %426 = vmatpush1.msra.mxu0 0.0
  %427 = vmatprep.subr.mxu0 0.0
  %428 = vmatpush1.msra.mxu0 0.0
  %429 = vmatprep.subr.mxu0 0.0
  %430 = vmatpush1.msra.mxu0 0.0
  %431 = vmatprep.subr.mxu0 0.0
  %432 = vmatpush1.msra.mxu0 0.0
  %433 = vmatprep.subr.mxu0 0.0
  %434 = vmatpush1.msra.mxu0 0.0
  %435 = vmatprep.subr.mxu0 0.0
  %436 = vmatpush1.msra.mxu0 0.0
  %437 = vmatprep.subr.mxu0 0.0
  %438 = vmatpush1.msra.mxu0 0.0
  %439 = vmatprep.subr.mxu0 0.0
  %440 = vmatpush1.msra.mxu0 0.0
  %441 = vmatprep.subr.mxu0 0.0
  %442 = vmatpush1.msra.mxu0 0.0
  %443 = vmatprep.subr.mxu0 0.0
  %444 = vmatpush1.msra.mxu0 0.0
  %445 = vmatprep.subr.mxu0 0.0
  %446 = vmatpush1.msra.mxu0 0.0
  %447 = vmatprep.subr.mxu0 0.0
  %448 = vmatpush1.msra.mxu0 0.0
  %449 = vmatprep.subr.mxu0 0.0
  %450 = vmatpush1.msra.mxu0 0.0
  %451 = vmatprep.subr.mxu0 0.0
  %452 = vmatpush1.msra.mxu0 0.0
  %453 = vmatprep.subr.mxu0 0.0
  %454 = vmatpush1.msra.mxu0 0.0
  %455 = vmatprep.subr.mxu0 0.0
  %456 = vmatpush1.msra.mxu0 0.0
  %457 = vmatprep.mubr.f32.mxu0 0.0
  %458 = vmatmul.mubr.f32.gmra.mrb[0].mxu0 %v235
  %v459 = vpop.f32.mrb[0].mxu0
  %v460 = vadd.f32 %v313, %v459
  %v461 = vpop.f32.mrb[0].mxu0
  %v462 = vadd.f32 %v317, %v461
  %463 = vdwg.mxu0
  %v464 = vmax.f32 %v389, 0.0
  %v465 = vmax.f32 %v391, 0.0
  %v466 = vmax.f32 %v460, 0.0
  %v467 = vmax.f32 %v462, 0.0
  %468 = vst [vmem:[%s5] sm:$0xff] %v464
  %469 = vst [vmem:[%s5 + $0x8] sm:$0xff] %v465
  %470 = vst [vmem:[%s5 + $0x10] sm:$0xff] %v466
  %471 = vst [vmem:[%s5 + $0x18] sm:$0xff] %v467
  // Predicated region
  $region22: #{autoencoder_forward.1} parent=0 // pred_check
    _
  $region23: #{autoencoder_forward.1} parent=0 // pred_check_branch
    %473 = sbr.rel (0) target = $region25
  $region24: #{autoencoder_forward.1} parent=0 // pred_region
    _
  $region25: #{autoencoder_forward.1} parent=0 // pred_fallthru
    _
  // Predicated region
  $region26: #{autoencoder_forward.1} parent=0 // pred_check
    _
  $region27: #{autoencoder_forward.1} parent=0 // pred_check_branch
    %475 = sbr.rel (0) target = $region29
  $region28: #{autoencoder_forward.1} parent=0 // pred_region
    _
  $region29: #{autoencoder_forward.1} parent=0 // pred_fallthru
    _

</llo_original>
